<compile_context>
chip_gen: v5e
topology: v5e:2x2
jax: 0.10.0
libtpu: 0.0.40
codegen_flags: <defaults>
</compile_context>

<pallas_src>
import jax
import jax.numpy as jnp
from jax.experimental import pallas as pl
from jax.experimental.pallas import tpu as pltpu

IN = 784    # input features
HID = 128   # hidden width, padded 100 -> 128 (lane-dense)
OUT = 128   # output width, padded 10 -> 128 (lane-dense stores)


def mlp_kernel(x_ref, w1_ref, b1_ref, w2_ref, b2_ref, w3_ref, b3_ref, o_ref):
    # x tile arrives as f32; cast to bf16 so all three matmuls use the bf16
    # MXU path with f32 accumulation. Biases stay f32, added after the dot.
    x = x_ref[...].astype(jnp.bfloat16)
    h1 = jnp.dot(x, w1_ref[...], preferred_element_type=jnp.float32) + b1_ref[...]
    h1 = jnp.maximum(h1, 0.0).astype(jnp.bfloat16)
    h2 = jnp.dot(h1, w2_ref[...], preferred_element_type=jnp.float32) + b2_ref[...]
    h2 = jnp.maximum(h2, 0.0).astype(jnp.bfloat16)
    out = jnp.dot(h2, w3_ref[...], preferred_element_type=jnp.float32) + b3_ref[...]
    o_ref[...] = out.astype(o_ref.dtype)


def _round_up(n, m):
    return ((n + m - 1) // m) * m


def _pad_to(arr, shape, dtype=None):
    pads = [(0, t - s) for s, t in zip(arr.shape, shape)]
    out = jnp.pad(arr, pads)
    return out.astype(dtype) if dtype is not None else out


def ewc_forward(x, params, *, tm=256):
    """Pallas implementation of EWC.forward(x) == self.model(x)."""
    w1, b1, w2, b2, w3, b3 = params
    B = x.shape[0]

    # Batch tile: at least one sublane group (8), at most `tm` rows so two
    # in-flight (TM, 784) f32 buffers stay well below v7x's 64 MiB VMEM.
    TM = min(tm, _round_up(B, 8))
    B_pad = _round_up(B, TM)
    x_pad = _pad_to(x.astype(jnp.float32), (B_pad, IN))

    # Lane-dense bf16 weights (zero-padded -> exact); f32 biases.
    w1p = _pad_to(w1, (IN, HID), jnp.bfloat16)
    w2p = _pad_to(w2, (HID, HID), jnp.bfloat16)
    w3p = _pad_to(w3, (HID, OUT), jnp.bfloat16)
    b1p = _pad_to(b1, (1, HID), jnp.float32)
    b2p = _pad_to(b2, (1, HID), jnp.float32)
    b3p = _pad_to(b3, (1, OUT), jnp.float32)

    const = lambda i: (0, 0)  # weights/biases resident in VMEM across steps

    flops = 2 * B_pad * (IN * HID + HID * HID + HID * OUT)
    bytes_accessed = (
        x_pad.size * 4
        + (w1p.size + w2p.size + w3p.size) * 2
        + (b1p.size + b2p.size + b3p.size) * 4
        + B_pad * OUT * 4
    )

    out = pl.pallas_call(
        mlp_kernel,
        out_shape=jax.ShapeDtypeStruct((B_pad, OUT), jnp.float32),
        grid=(B_pad // TM,),
        in_specs=[
            pl.BlockSpec((TM, IN), lambda i: (i, 0)),
            pl.BlockSpec((IN, HID), const),
            pl.BlockSpec((1, HID), const),
            pl.BlockSpec((HID, HID), const),
            pl.BlockSpec((1, HID), const),
            pl.BlockSpec((HID, OUT), const),
            pl.BlockSpec((1, OUT), const),
        ],
        out_specs=pl.BlockSpec((TM, OUT), lambda i: (i, 0)),
        compiler_params=pltpu.CompilerParams(
            dimension_semantics=("parallel",)),
        cost_estimate=pl.CostEstimate(
            flops=flops, transcendentals=0, bytes_accessed=bytes_accessed),
    )(x_pad, w1p, b1p, w2p, b2p, w3p, b3p)

    # Slice padded batch rows and lane-padded logits back to (B, 10).
    return out[:B, :10]


def init_params(key):
    """Deterministic init mimicking nn.Linear default (uniform +/- 1/sqrt(fan_in))."""
    dims = [(784, 100), (100, 100), (100, 10)]
    params = []
    for (fan_in, fan_out) in dims:
        key, kw, kb = jax.random.split(key, 3)
        bound = 1.0 / jnp.sqrt(fan_in)
        w = jax.random.uniform(kw, (fan_in, fan_out), jnp.float32, -bound, bound)
        b = jax.random.uniform(kb, (1, fan_out), jnp.float32, -bound, bound)
        params += [w, b]
    return params


def reference_forward(x, params):
    """Pure-JAX reference with the same bf16-weights / f32-accumulate math."""
    w1, b1, w2, b2, w3, b3 = params
    bf = jnp.bfloat16
    h1 = jnp.maximum(
        jnp.dot(x.astype(bf), w1.astype(bf),
                preferred_element_type=jnp.float32) + b1, 0.0)
    h2 = jnp.maximum(
        jnp.dot(h1.astype(bf), w2.astype(bf),
                preferred_element_type=jnp.float32) + b2, 0.0)
    return jnp.dot(h2.astype(bf), w3.astype(bf),
                   preferred_element_type=jnp.float32) + b3


# TODO(synk): fisher_loss / step / update_prior are training-time utilities
# (loss + autograd-based Fisher estimation), not part of forward(); only the
# forward MLP hot path is implemented as a Pallas kernel.

if __name__ == "__main__":
    key = jax.random.PRNGKey(0)
    key, kx = jax.random.split(key)
    batch = 8
    x = jax.random.normal(kx, (batch, 784), jnp.float32)
    params = init_params(key)

    out = ewc_forward(x, params)
    out = jax.block_until_ready(out)

    ref = reference_forward(x, params)
    assert out.shape == (batch, 10)
    assert jnp.allclose(out, ref, atol=2e-2, rtol=2e-2), (
        float(jnp.max(jnp.abs(out - ref))))
    print("KERNEL_OK")
</pallas_src>

<mosaic_0001>
module attributes {stable_mosaic.version = 11 : i64} {
  func.func @mlp_kernel(%arg0: i32, %arg1: memref<8x784xf32, #tpu.memory_space<vmem>>, %arg2: memref<784x128xbf16, #tpu.memory_space<vmem>>, %arg3: memref<1x128xf32, #tpu.memory_space<vmem>>, %arg4: memref<128x128xbf16, #tpu.memory_space<vmem>>, %arg5: memref<1x128xf32, #tpu.memory_space<vmem>>, %arg6: memref<128x128xbf16, #tpu.memory_space<vmem>>, %arg7: memref<1x128xf32, #tpu.memory_space<vmem>>, %arg8: memref<8x128xf32, #tpu.memory_space<vmem>>) attributes {dimension_semantics = [#tpu.dimension_semantics<parallel>], iteration_bounds = array<i64: 1>, scalar_prefetch = 0 : i64, scratch_operands = 0 : i64, tpu.core_type = #tpu.core_type<tc>, window_params = [{transform_indices = @transform_0, window_bounds = array<i64: 8, 784>}, {pipeline_mode = #tpu.pipeline_mode<synchronous>, transform_indices = @transform_1, window_bounds = array<i64: 784, 128>}, {pipeline_mode = #tpu.pipeline_mode<synchronous>, transform_indices = @transform_2, window_bounds = array<i64: 1, 128>}, {pipeline_mode = #tpu.pipeline_mode<synchronous>, transform_indices = @transform_3, window_bounds = array<i64: 128, 128>}, {pipeline_mode = #tpu.pipeline_mode<synchronous>, transform_indices = @transform_4, window_bounds = array<i64: 1, 128>}, {pipeline_mode = #tpu.pipeline_mode<synchronous>, transform_indices = @transform_5, window_bounds = array<i64: 128, 128>}, {pipeline_mode = #tpu.pipeline_mode<synchronous>, transform_indices = @transform_6, window_bounds = array<i64: 1, 128>}, {transform_indices = @transform_7, window_bounds = array<i64: 8, 128>}]} {
    %c0 = arith.constant 0 : index
    %c0_0 = arith.constant 0 : index
    %0 = vector.load %arg1[%c0, %c0_0] : memref<8x784xf32, #tpu.memory_space<vmem>>, vector<8x784xf32>
    %1 = arith.truncf %0 : vector<8x784xf32> to vector<8x784xbf16>
    %c0_1 = arith.constant 0 : index
    %c0_2 = arith.constant 0 : index
    %2 = vector.load %arg2[%c0_1, %c0_2] : memref<784x128xbf16, #tpu.memory_space<vmem>>, vector<784x128xbf16>
    %cst = arith.constant dense<0.000000e+00> : vector<8x128xf32>
    %3 = tpu.matmul %1, %2, %cst {dimension_numbers = #tpu.dot_dimension_numbers<[1], [0], [0], [1], [0, 0, 1, 1], [], []>} : vector<8x784xbf16>, vector<784x128xbf16>, vector<8x128xf32> -> vector<8x128xf32>
    %c0_3 = arith.constant 0 : index
    %c0_4 = arith.constant 0 : index
    %4 = vector.load %arg3[%c0_3, %c0_4] : memref<1x128xf32, #tpu.memory_space<vmem>>, vector<1x128xf32>
    %5 = vector.broadcast %4 : vector<1x128xf32> to vector<8x128xf32>
    %6 = arith.addf %3, %5 : vector<8x128xf32>
    %cst_5 = arith.constant 0.000000e+00 : f32
    %7 = vector.broadcast %cst_5 : f32 to vector<8x128xf32>
    %8 = arith.maximumf %6, %7 : vector<8x128xf32>
    %9 = arith.truncf %8 : vector<8x128xf32> to vector<8x128xbf16>
    %c0_6 = arith.constant 0 : index
    %c0_7 = arith.constant 0 : index
    %10 = vector.load %arg4[%c0_6, %c0_7] : memref<128x128xbf16, #tpu.memory_space<vmem>>, vector<128x128xbf16>
    %cst_8 = arith.constant dense<0.000000e+00> : vector<8x128xf32>
    %11 = tpu.matmul %9, %10, %cst_8 {dimension_numbers = #tpu.dot_dimension_numbers<[1], [0], [0], [1], [0, 0, 1, 1], [], []>} : vector<8x128xbf16>, vector<128x128xbf16>, vector<8x128xf32> -> vector<8x128xf32>
    %c0_9 = arith.constant 0 : index
    %c0_10 = arith.constant 0 : index
    %12 = vector.load %arg5[%c0_9, %c0_10] : memref<1x128xf32, #tpu.memory_space<vmem>>, vector<1x128xf32>
    %13 = vector.broadcast %12 : vector<1x128xf32> to vector<8x128xf32>
    %14 = arith.addf %11, %13 : vector<8x128xf32>
    %cst_11 = arith.constant 0.000000e+00 : f32
    %15 = vector.broadcast %cst_11 : f32 to vector<8x128xf32>
    %16 = arith.maximumf %14, %15 : vector<8x128xf32>
    %17 = arith.truncf %16 : vector<8x128xf32> to vector<8x128xbf16>
    %c0_12 = arith.constant 0 : index
    %c0_13 = arith.constant 0 : index
    %18 = vector.load %arg6[%c0_12, %c0_13] : memref<128x128xbf16, #tpu.memory_space<vmem>>, vector<128x128xbf16>
    %cst_14 = arith.constant dense<0.000000e+00> : vector<8x128xf32>
    %19 = tpu.matmul %17, %18, %cst_14 {dimension_numbers = #tpu.dot_dimension_numbers<[1], [0], [0], [1], [0, 0, 1, 1], [], []>} : vector<8x128xbf16>, vector<128x128xbf16>, vector<8x128xf32> -> vector<8x128xf32>
    %c0_15 = arith.constant 0 : index
    %c0_16 = arith.constant 0 : index
    %20 = vector.load %arg7[%c0_15, %c0_16] : memref<1x128xf32, #tpu.memory_space<vmem>>, vector<1x128xf32>
    %21 = vector.broadcast %20 : vector<1x128xf32> to vector<8x128xf32>
    %22 = arith.addf %19, %21 : vector<8x128xf32>
    %c0_17 = arith.constant 0 : index
    %c0_18 = arith.constant 0 : index
    %23 = vector.load %arg8[%c0_17, %c0_18] : memref<8x128xf32, #tpu.memory_space<vmem>>, vector<8x128xf32>
    tpu.vector_store %arg8[%c0_17, %c0_18], %22 {strides = array<i32>} : memref<8x128xf32, #tpu.memory_space<vmem>>, vector<8x128xf32>,
    return
  }
  func.func @transform_0(%arg0: i32) -> (i32, i32) {
    %c0_i32 = arith.constant 0 : i32
    %c0_i32_0 = arith.constant 0 : i32
    return %arg0, %c0_i32 : i32, i32
  }
  func.func @transform_1(%arg0: i32) -> (i32, i32) {
    %c0_i32 = arith.constant 0 : i32
    %c0_i32_0 = arith.constant 0 : i32
    %c0_i32_1 = arith.constant 0 : i32
    return %c0_i32, %c0_i32_0 : i32, i32
  }
  func.func @transform_2(%arg0: i32) -> (i32, i32) {
    %c0_i32 = arith.constant 0 : i32
    %c0_i32_0 = arith.constant 0 : i32
    %c0_i32_1 = arith.constant 0 : i32
    return %c0_i32, %c0_i32_0 : i32, i32
  }
  func.func @transform_3(%arg0: i32) -> (i32, i32) {
    %c0_i32 = arith.constant 0 : i32
    %c0_i32_0 = arith.constant 0 : i32
    %c0_i32_1 = arith.constant 0 : i32
    return %c0_i32, %c0_i32_0 : i32, i32
  }
  func.func @transform_4(%arg0: i32) -> (i32, i32) {
    %c0_i32 = arith.constant 0 : i32
    %c0_i32_0 = arith.constant 0 : i32
    %c0_i32_1 = arith.constant 0 : i32
    return %c0_i32, %c0_i32_0 : i32, i32
  }
  func.func @transform_5(%arg0: i32) -> (i32, i32) {
    %c0_i32 = arith.constant 0 : i32
    %c0_i32_0 = arith.constant 0 : i32
    %c0_i32_1 = arith.constant 0 : i32
    return %c0_i32, %c0_i32_0 : i32, i32
  }
  func.func @transform_6(%arg0: i32) -> (i32, i32) {
    %c0_i32 = arith.constant 0 : i32
    %c0_i32_0 = arith.constant 0 : i32
    %c0_i32_1 = arith.constant 0 : i32
    return %c0_i32, %c0_i32_0 : i32, i32
  }
  func.func @transform_7(%arg0: i32) -> (i32, i32) {
    %c0_i32 = arith.constant 0 : i32
    %c0_i32_0 = arith.constant 0 : i32
    return %arg0, %c0_i32 : i32, i32
  }
}

</mosaic_0001>

<llo_original>
// kernel: tpu_custom_call.1
$region0: #{tpu_custom_call.1}
  #allocation0 [shape = 'u32[]', space=smem, size = 0x4, offset = 0x4, fixed_abs, tag = 'smem constant byte address 0x4 - core index']
  #allocation1 [shape = 'u32[72,128]{1,0:T(1,128)}', space=vmem, size = 0x9000, scoped, tag = 'internal scratch']
  %s0 = inlined_call_operand.hbm [shape: f32[8,784], index: 0, kind: input, shape index: {}]
  %s1 = inlined_call_operand.hbm [shape: bf16[784,128], index: 1, kind: input, shape index: {}]
  %s2 = inlined_call_operand.vmem [shape: f32[1,128], index: 2, kind: input, shape index: {}]
  %s3 = inlined_call_operand.hbm [shape: bf16[128,128], index: 3, kind: input, shape index: {}]
  %s4 = inlined_call_operand.vmem [shape: f32[1,128], index: 4, kind: input, shape index: {}]
  %s5 = inlined_call_operand.hbm [shape: bf16[128,128], index: 5, kind: input, shape index: {}]
  %s6 = inlined_call_operand.vmem [shape: f32[1,128], index: 6, kind: input, shape index: {}]
  %s7 = inlined_call_operand.hbm [shape: f32[8,128], index: 7, kind: output, shape index: {}]
  %s8 = sld [smem:[#allocation0]]
  $region54: #{tpu_custom_call.1} parent=0
    _
  %s10 = ssub.s32 1, %s8
  %s11 = scalar_select 0, %s10, %s8
  $region1: #{tpu_custom_call.1} parent=0
    #allocation2 [shape = 'u8[28672]{0}', space=vmem, size = 0x7000, scoped, tag = 'input window, operand 0, single buffered']
    #allocation3 [shape = 's32[1]{0}', space=sflag, size = 0x4, scoped, tag = 'scoped memory for tpu_custom_call.1']
    #allocation4 [shape = 's32[1]{0}', space=sflag, size = 0x4, scoped, tag = 'scoped memory for tpu_custom_call.1']
    #allocation5 [shape = 'u8[200704]{0}', space=vmem, size = 0x31000, scoped, tag = 'input window, operand 1, single buffered']
    #allocation6 [shape = 's32[1]{0}', space=sflag, size = 0x4, scoped, tag = 'scoped memory for tpu_custom_call.1']
    #allocation7 [shape = 'u8[32768]{0}', space=vmem, size = 0x8000, scoped, tag = 'input window, operand 3, single buffered']
    #allocation8 [shape = 'u8[32768]{0}', space=vmem, size = 0x8000, scoped, tag = 'input window, operand 5, single buffered']
    #allocation9 [shape = 's32[1]{0}', space=sflag, size = 0x4, scoped, tag = 'scoped memory for tpu_custom_call.1']
    #allocation10 [shape = 'u8[4096]{0}', space=vmem, size = 0x1000, scoped, tag = 'output window, operand 0, single buffered']
    %12 = vsyncpa [#allocation3], 0
    %13 = vsyncpa [#allocation6], 0
    %14 = vsyncpa [#allocation9], 0
    %15 = vsyncpa [#allocation4], 0
    // Predicated region
    $region2: #{tpu_custom_call.1} parent=1 // pred_check
      _
    $region3: #{tpu_custom_call.1} parent=1 // pred_check_branch
      %17 = sbr.rel (0) target = $region5
    $region4: #{tpu_custom_call.1} parent=1 // pred_region
      %19 = vsyncadd [#allocation3], 0
      %s21 = sshll.u32 %s0, 4
      %s22 = int_to_ptr.hbm [resolvable:$true] %s21
      %s23 = sshll.u32 [#allocation2], 4
      %s24 = int_to_ptr.vmem [resolvable:$true] %s23
      %26 = dma.hbm_to_vmem [thread:$0]  %s22, 896, %s24, [#allocation3]
    $region5: #{tpu_custom_call.1} parent=1 // pred_fallthru
      _
    // Predicated region
    $region6: #{tpu_custom_call.1} parent=1 // pred_check
      _
    $region7: #{tpu_custom_call.1} parent=1 // pred_check_branch
      %28 = sbr.rel (0) target = $region9
    $region8: #{tpu_custom_call.1} parent=1 // pred_region
      %30 = vsyncadd [#allocation6], 0
      %s31 = sshll.u32 %s1, 4
      %s32 = int_to_ptr.hbm [resolvable:$true] %s31
      %s33 = sshll.u32 [#allocation5], 4
      %s34 = int_to_ptr.vmem [resolvable:$true] %s33
      %39 = dma.hbm_to_vmem [thread:$0]  %s32, 6272, %s34, [#allocation6], 64, 64, 4
    $region9: #{tpu_custom_call.1} parent=1 // pred_fallthru
      _
    // Predicated region
    $region10: #{tpu_custom_call.1} parent=1 // pred_check
      _
    $region11: #{tpu_custom_call.1} parent=1 // pred_check_branch
      %41 = sbr.rel (0) target = $region13
    $region12: #{tpu_custom_call.1} parent=1 // pred_region
      _
    $region13: #{tpu_custom_call.1} parent=1 // pred_fallthru
      _
    // Predicated region
    $region14: #{tpu_custom_call.1} parent=1 // pred_check
      _
    $region15: #{tpu_custom_call.1} parent=1 // pred_check_branch
      %43 = sbr.rel (0) target = $region17
    $region16: #{tpu_custom_call.1} parent=1 // pred_region
      %45 = vsyncadd [#allocation6], 0
      %s46 = sshll.u32 %s3, 4
      %s47 = int_to_ptr.hbm [resolvable:$true] %s46
      %s48 = sshll.u32 [#allocation7], 4
      %s49 = int_to_ptr.vmem [resolvable:$true] %s48
      %54 = dma.hbm_to_vmem [thread:$0]  %s47, 1024, %s49, [#allocation6], 64, 64, 4
    $region17: #{tpu_custom_call.1} parent=1 // pred_fallthru
      _
    // Predicated region
    $region18: #{tpu_custom_call.1} parent=1 // pred_check
      _
    $region19: #{tpu_custom_call.1} parent=1 // pred_check_branch
      %56 = sbr.rel (0) target = $region21
    $region20: #{tpu_custom_call.1} parent=1 // pred_region
      _
    $region21: #{tpu_custom_call.1} parent=1 // pred_fallthru
      _
    // Predicated region
    $region22: #{tpu_custom_call.1} parent=1 // pred_check
      _
    $region23: #{tpu_custom_call.1} parent=1 // pred_check_branch
      %58 = sbr.rel (0) target = $region25
    $region24: #{tpu_custom_call.1} parent=1 // pred_region
      %60 = vsyncadd [#allocation9], 0
      %s61 = sshll.u32 %s5, 4
      %s62 = int_to_ptr.hbm [resolvable:$true] %s61
      %s63 = sshll.u32 [#allocation8], 4
      %s64 = int_to_ptr.vmem [resolvable:$true] %s63
      %69 = dma.hbm_to_vmem [thread:$0]  %s62, 1024, %s64, [#allocation9], 64, 64, 4
    $region25: #{tpu_custom_call.1} parent=1 // pred_fallthru
      _
    // Predicated region
    $region26: #{tpu_custom_call.1} parent=1 // pred_check
      _
    $region27: #{tpu_custom_call.1} parent=1 // pred_check_branch
      %71 = sbr.rel (0) target = $region29
    $region28: #{tpu_custom_call.1} parent=1 // pred_region
      _
    $region29: #{tpu_custom_call.1} parent=1 // pred_fallthru
      _
    // Predicated region
    $region30: #{tpu_custom_call.1} parent=1 // pred_check
      _
    $region31: #{tpu_custom_call.1} parent=1 // pred_check_branch
      %73 = sbr.rel (0) target = $region33
    $region32: #{tpu_custom_call.1} parent=1 // pred_region
      %75 = dma.done [#allocation3], 896
    $region33: #{tpu_custom_call.1} parent=1 // pred_fallthru
      _
    // Predicated region
    $region34: #{tpu_custom_call.1} parent=1 // pred_check
      _
    $region35: #{tpu_custom_call.1} parent=1 // pred_check_branch
      %77 = sbr.rel (0) target = $region37
    $region36: #{tpu_custom_call.1} parent=1 // pred_region
      %79 = dma.done [#allocation6], 6272
    $region37: #{tpu_custom_call.1} parent=1 // pred_fallthru
      _
    // Predicated region
    $region38: #{tpu_custom_call.1} parent=1 // pred_check
      _
    $region39: #{tpu_custom_call.1} parent=1 // pred_check_branch
      %81 = sbr.rel (0) target = $region41
    $region40: #{tpu_custom_call.1} parent=1 // pred_region
      %83 = dma.done [#allocation6], 1024
    $region41: #{tpu_custom_call.1} parent=1 // pred_fallthru
      _
    // Predicated region
    $region42: #{tpu_custom_call.1} parent=1 // pred_check
      _
    $region43: #{tpu_custom_call.1} parent=1 // pred_check_branch
      %85 = sbr.rel (0) target = $region45
    $region44: #{tpu_custom_call.1} parent=1 // pred_region
      %87 = dma.done [#allocation9], 1024
    $region45: #{tpu_custom_call.1} parent=1 // pred_fallthru
      _
    %v89 = vld [vmem:[#allocation2] sm:$0xff]
    %v90 = vld [vmem:[#allocation2 + $0x8] sm:$0xff]
    %v91 = vld [vmem:[#allocation2 + $0x10] sm:$0xff]
    %v92 = vld [vmem:[#allocation2 + $0x18] sm:$0xff]
    %v93 = vld [vmem:[#allocation2 + $0x20] sm:$0xff]
    %v94 = vld [vmem:[#allocation2 + $0x28] sm:$0xff]
    %v95 = vld [vmem:[#allocation2 + $0x30] sm:$0xff]
    %v96 = vpack.c.bf16 %v89, %v89
    %v97 = vpack.c.bf16 %v90, %v90
    %v98 = vpack.c.bf16 %v91, %v91
    %v99 = vpack.c.bf16 %v92, %v92
    %v100 = vpack.c.bf16 %v93, %v93
    %v101 = vpack.c.bf16 %v94, %v94
    %v102 = vpack.c.bf16 %v95, %v95
    %v103 = vld [vmem:[#allocation5] sm:$0xf]
    %v104 = vld [vmem:[#allocation5 + $0x4] sm:$0xf]
    %v105 = vld [vmem:[#allocation5 + $0x8] sm:$0xf]
    %v106 = vld [vmem:[#allocation5 + $0xc] sm:$0xf]
    %v107 = vld [vmem:[#allocation5 + $0x10] sm:$0xf]
    %v108 = vld [vmem:[#allocation5 + $0x14] sm:$0xf]
    %v109 = vld [vmem:[#allocation5 + $0x18] sm:$0xf]
    %v110 = vld [vmem:[#allocation5 + $0x1c] sm:$0xf]
    %v111 = vld [vmem:[#allocation5 + $0x20] sm:$0xf]
    %v112 = vld [vmem:[#allocation5 + $0x24] sm:$0xf]
    %v113 = vld [vmem:[#allocation5 + $0x28] sm:$0xf]
    %v114 = vld [vmem:[#allocation5 + $0x2c] sm:$0xf]
    %v115 = vld [vmem:[#allocation5 + $0x30] sm:$0xf]
    %v116 = vld [vmem:[#allocation5 + $0x34] sm:$0xf]
    %v117 = vld [vmem:[#allocation5 + $0x38] sm:$0xf]
    %v118 = vld [vmem:[#allocation5 + $0x3c] sm:$0xf]
    %v119 = vld [vmem:[#allocation5 + $0x40] sm:$0xf]
    %v120 = vld [vmem:[#allocation5 + $0x44] sm:$0xf]
    %v121 = vld [vmem:[#allocation5 + $0x48] sm:$0xf]
    %v122 = vld [vmem:[#allocation5 + $0x4c] sm:$0xf]
    %v123 = vld [vmem:[#allocation5 + $0x50] sm:$0xf]
    %v124 = vld [vmem:[#allocation5 + $0x54] sm:$0xf]
    %v125 = vld [vmem:[#allocation5 + $0x58] sm:$0xf]
    %v126 = vld [vmem:[#allocation5 + $0x5c] sm:$0xf]
    %v127 = vld [vmem:[#allocation5 + $0x60] sm:$0xf]
    %v128 = vld [vmem:[#allocation5 + $0x64] sm:$0xf]
    %v129 = vld [vmem:[#allocation5 + $0x68] sm:$0xf]
    %v130 = vld [vmem:[#allocation5 + $0x6c] sm:$0xf]
    %v131 = vld [vmem:[#allocation5 + $0x70] sm:$0xf]
    %v132 = vld [vmem:[#allocation5 + $0x74] sm:$0xf]
    %v133 = vld [vmem:[#allocation5 + $0x78] sm:$0xf]
    %v134 = vld [vmem:[#allocation5 + $0x7c] sm:$0xf]
    %v135 = vld [vmem:[#allocation5 + $0x80] sm:$0xf]
    %v136 = vld [vmem:[#allocation5 + $0x84] sm:$0xf]
    %v137 = vld [vmem:[#allocation5 + $0x88] sm:$0xf]
    %v138 = vld [vmem:[#allocation5 + $0x8c] sm:$0xf]
    %v139 = vld [vmem:[#allocation5 + $0x90] sm:$0xf]
    %v140 = vld [vmem:[#allocation5 + $0x94] sm:$0xf]
    %v141 = vld [vmem:[#allocation5 + $0x98] sm:$0xf]
    %v142 = vld [vmem:[#allocation5 + $0x9c] sm:$0xf]
    %v143 = vld [vmem:[#allocation5 + $0xa0] sm:$0xf]
    %v144 = vld [vmem:[#allocation5 + $0xa4] sm:$0xf]
    %v145 = vld [vmem:[#allocation5 + $0xa8] sm:$0xf]
    %v146 = vld [vmem:[#allocation5 + $0xac] sm:$0xf]
    %v147 = vld [vmem:[#allocation5 + $0xb0] sm:$0xf]
    %v148 = vld [vmem:[#allocation5 + $0xb4] sm:$0xf]
    %v149 = vld [vmem:[#allocation5 + $0xb8] sm:$0xf]
    %v150 = vld [vmem:[#allocation5 + $0xbc] sm:$0xf]
    %v151 = vld [vmem:[#allocation5 + $0xc0] sm:$0xf]
    %v152 = vld [vmem:[#allocation5 + $0xc4] sm:$0xf]
    %v153 = vld [vmem:[#allocation5 + $0xc8] sm:$0xf]
    %v154 = vld [vmem:[#allocation5 + $0xcc] sm:$0xf]
    %v155 = vld [vmem:[#allocation5 + $0xd0] sm:$0xf]
    %v156 = vld [vmem:[#allocation5 + $0xd4] sm:$0xf]
    %v157 = vld [vmem:[#allocation5 + $0xd8] sm:$0xf]
    %v158 = vld [vmem:[#allocation5 + $0xdc] sm:$0xf]
    %v159 = vld [vmem:[#allocation5 + $0xe0] sm:$0xf]
    %v160 = vld [vmem:[#allocation5 + $0xe4] sm:$0xf]
    %v161 = vld [vmem:[#allocation5 + $0xe8] sm:$0xf]
    %v162 = vld [vmem:[#allocation5 + $0xec] sm:$0xf]
    %v163 = vld [vmem:[#allocation5 + $0xf0] sm:$0xf]
    %v164 = vld [vmem:[#allocation5 + $0xf4] sm:$0xf]
    %v165 = vld [vmem:[#allocation5 + $0xf8] sm:$0xf]
    %v166 = vld [vmem:[#allocation5 + $0xfc] sm:$0xf]
    %v167 = vld [vmem:[#allocation5 + $0x100] sm:$0xf]
    %v168 = vld [vmem:[#allocation5 + $0x104] sm:$0xf]
    %v169 = vld [vmem:[#allocation5 + $0x108] sm:$0xf]
    %v170 = vld [vmem:[#allocation5 + $0x10c] sm:$0xf]
    %v171 = vld [vmem:[#allocation5 + $0x110] sm:$0xf]
    %v172 = vld [vmem:[#allocation5 + $0x114] sm:$0xf]
    %v173 = vld [vmem:[#allocation5 + $0x118] sm:$0xf]
    %v174 = vld [vmem:[#allocation5 + $0x11c] sm:$0xf]
    %v175 = vld [vmem:[#allocation5 + $0x120] sm:$0xf]
    %v176 = vld [vmem:[#allocation5 + $0x124] sm:$0xf]
    %v177 = vld [vmem:[#allocation5 + $0x128] sm:$0xf]
    %v178 = vld [vmem:[#allocation5 + $0x12c] sm:$0xf]
    %v179 = vld [vmem:[#allocation5 + $0x130] sm:$0xf]
    %v180 = vld [vmem:[#allocation5 + $0x134] sm:$0xf]
    %v181 = vld [vmem:[#allocation5 + $0x138] sm:$0xf]
    %v182 = vld [vmem:[#allocation5 + $0x13c] sm:$0xf]
    %v183 = vld [vmem:[#allocation5 + $0x140] sm:$0xf]
    %v184 = vld [vmem:[#allocation5 + $0x144] sm:$0xf]
    %v185 = vld [vmem:[#allocation5 + $0x148] sm:$0xf]
    %v186 = vld [vmem:[#allocation5 + $0x14c] sm:$0xf]
    %v187 = vld [vmem:[#allocation5 + $0x150] sm:$0xf]
    %v188 = vld [vmem:[#allocation5 + $0x154] sm:$0xf]
    %v189 = vld [vmem:[#allocation5 + $0x158] sm:$0xf]
    %v190 = vld [vmem:[#allocation5 + $0x15c] sm:$0xf]
    %v191 = vld [vmem:[#allocation5 + $0x160] sm:$0xf]
    %v192 = vld [vmem:[#allocation5 + $0x164] sm:$0xf]
    %v193 = vld [vmem:[#allocation5 + $0x168] sm:$0xf]
    %v194 = vld [vmem:[#allocation5 + $0x16c] sm:$0xf]
    %v195 = vld [vmem:[#allocation5 + $0x170] sm:$0xf]
    %v196 = vld [vmem:[#allocation5 + $0x174] sm:$0xf]
    %v197 = vld [vmem:[#allocation5 + $0x178] sm:$0xf]
    %v198 = vld [vmem:[#allocation5 + $0x17c] sm:$0xf]
    %v199 = vld [vmem:[#allocation5 + $0x180] sm:$0xf]
    %v200 = vld [vmem:[#allocation5 + $0x184] sm:$0xf]
    %v201 = vld [vmem:[%s2] sm:$0x1]
    %v203 = vperm.slane %v201, 0
    %v303 = vunpack.c.l.b16 %v103
    %v304 = vunpack.c.l.b16 %v104
    %v305 = vunpack.c.l.b16 %v105
    %v306 = vunpack.c.l.b16 %v106
    %v307 = vunpack.c.l.b16 %v107
    %v308 = vunpack.c.l.b16 %v108
    %v309 = vunpack.c.l.b16 %v109
    %v310 = vunpack.c.l.b16 %v110
    %v311 = vunpack.c.l.b16 %v111
    %v312 = vunpack.c.l.b16 %v112
    %v313 = vunpack.c.l.b16 %v113
    %v314 = vunpack.c.l.b16 %v114
    %v315 = vunpack.c.l.b16 %v115
    %v316 = vunpack.c.l.b16 %v116
    %v317 = vunpack.c.l.b16 %v117
    %v318 = vunpack.c.l.b16 %v118
    %v319 = vunpack.c.l.b16 %v119
    %v320 = vunpack.c.l.b16 %v120
    %v321 = vunpack.c.l.b16 %v121
    %v322 = vunpack.c.l.b16 %v122
    %v323 = vunpack.c.l.b16 %v123
    %v324 = vunpack.c.l.b16 %v124
    %v325 = vunpack.c.l.b16 %v125
    %v326 = vunpack.c.l.b16 %v126
    %v327 = vunpack.c.l.b16 %v127
    %v328 = vunpack.c.l.b16 %v128
    %v329 = vunpack.c.l.b16 %v129
    %v330 = vunpack.c.l.b16 %v130
    %v331 = vunpack.c.l.b16 %v131
    %v332 = vunpack.c.l.b16 %v132
    %v333 = vunpack.c.l.b16 %v133
    %v334 = vunpack.c.l.b16 %v134
    %v335 = vunpack.c.l.b16 %v135
    %v336 = vunpack.c.l.b16 %v136
    %v337 = vunpack.c.l.b16 %v137
    %v338 = vunpack.c.l.b16 %v138
    %v339 = vunpack.c.l.b16 %v139
    %v340 = vunpack.c.l.b16 %v140
    %v341 = vunpack.c.l.b16 %v141
    %v342 = vunpack.c.l.b16 %v142
    %v343 = vunpack.c.l.b16 %v143
    %v344 = vunpack.c.l.b16 %v144
    %v345 = vunpack.c.l.b16 %v145
    %v346 = vunpack.c.l.b16 %v146
    %v347 = vunpack.c.l.b16 %v147
    %v348 = vunpack.c.l.b16 %v148
    %v349 = vunpack.c.l.b16 %v149
    %v350 = vunpack.c.l.b16 %v150
    %v351 = vunpack.c.l.b16 %v151
    %v352 = vunpack.c.l.b16 %v152
    %v353 = vunpack.c.l.b16 %v153
    %v354 = vunpack.c.l.b16 %v154
    %v355 = vunpack.c.l.b16 %v155
    %v356 = vunpack.c.l.b16 %v156
    %v357 = vunpack.c.l.b16 %v157
    %v358 = vunpack.c.l.b16 %v158
    %v359 = vunpack.c.l.b16 %v159
    %v360 = vunpack.c.l.b16 %v160
    %v361 = vunpack.c.l.b16 %v161
    %v362 = vunpack.c.l.b16 %v162
    %v363 = vunpack.c.l.b16 %v163
    %v364 = vunpack.c.l.b16 %v164
    %v365 = vunpack.c.l.b16 %v165
    %v366 = vunpack.c.l.b16 %v166
    %v367 = vunpack.c.l.b16 %v167
    %v368 = vunpack.c.l.b16 %v168
    %v369 = vunpack.c.l.b16 %v169
    %v370 = vunpack.c.l.b16 %v170
    %v371 = vunpack.c.l.b16 %v171
    %v372 = vunpack.c.l.b16 %v172
    %v373 = vunpack.c.l.b16 %v173
    %v374 = vunpack.c.l.b16 %v174
    %v375 = vunpack.c.l.b16 %v175
    %v376 = vunpack.c.l.b16 %v176
    %v377 = vunpack.c.l.b16 %v177
    %v378 = vunpack.c.l.b16 %v178
    %v379 = vunpack.c.l.b16 %v179
    %v380 = vunpack.c.l.b16 %v180
    %v381 = vunpack.c.l.b16 %v181
    %v382 = vunpack.c.l.b16 %v182
    %v383 = vunpack.c.l.b16 %v183
    %v384 = vunpack.c.l.b16 %v184
    %v385 = vunpack.c.l.b16 %v185
    %v386 = vunpack.c.l.b16 %v186
    %v387 = vunpack.c.l.b16 %v187
    %v388 = vunpack.c.l.b16 %v188
    %v389 = vunpack.c.l.b16 %v189
    %v390 = vunpack.c.l.b16 %v190
    %v391 = vunpack.c.l.b16 %v191
    %v392 = vunpack.c.l.b16 %v192
    %v393 = vunpack.c.l.b16 %v193
    %v394 = vunpack.c.l.b16 %v194
    %v395 = vunpack.c.l.b16 %v195
    %v396 = vunpack.c.l.b16 %v196
    %v397 = vunpack.c.l.b16 %v197
    %v398 = vunpack.c.l.b16 %v198
    %v399 = vunpack.c.l.b16 %v199
    %v400 = vunpack.c.l.b16 %v200
    %v401 = vpack.c.b16 %v304, %v303
    %v402 = vpack.c.b16 %v306, %v305
    %v403 = vpack.c.b16 %v308, %v307
    %v404 = vpack.c.b16 %v310, %v309
    %v405 = vpack.c.b16 %v312, %v311
    %v406 = vpack.c.b16 %v314, %v313
    %v407 = vpack.c.b16 %v316, %v315
    %v408 = vpack.c.b16 %v318, %v317
    %v409 = vpack.c.b16 %v320, %v319
    %v410 = vpack.c.b16 %v322, %v321
    %v411 = vpack.c.b16 %v324, %v323
    %v412 = vpack.c.b16 %v326, %v325
    %v413 = vpack.c.b16 %v328, %v327
    %v414 = vpack.c.b16 %v330, %v329
    %v415 = vpack.c.b16 %v332, %v331
    %v416 = vpack.c.b16 %v334, %v333
    %v417 = vpack.c.b16 %v336, %v335
    %v418 = vpack.c.b16 %v338, %v337
    %v419 = vpack.c.b16 %v340, %v339
    %v420 = vpack.c.b16 %v342, %v341
    %v421 = vpack.c.b16 %v344, %v343
    %v422 = vpack.c.b16 %v346, %v345
    %v423 = vpack.c.b16 %v348, %v347
    %v424 = vpack.c.b16 %v350, %v349
    %v425 = vpack.c.b16 %v352, %v351
    %v426 = vpack.c.b16 %v354, %v353
    %v427 = vpack.c.b16 %v356, %v355
    %v428 = vpack.c.b16 %v358, %v357
    %v429 = vpack.c.b16 %v360, %v359
    %v430 = vpack.c.b16 %v362, %v361
    %v431 = vpack.c.b16 %v364, %v363
    %v432 = vpack.c.b16 %v366, %v365
    %v433 = vpack.c.b16 %v368, %v367
    %v434 = vpack.c.b16 %v370, %v369
    %v435 = vpack.c.b16 %v372, %v371
    %v436 = vpack.c.b16 %v374, %v373
    %v437 = vpack.c.b16 %v376, %v375
    %v438 = vpack.c.b16 %v378, %v377
    %v439 = vpack.c.b16 %v380, %v379
    %v440 = vpack.c.b16 %v382, %v381
    %v441 = vpack.c.b16 %v384, %v383
    %v442 = vpack.c.b16 %v386, %v385
    %v443 = vpack.c.b16 %v388, %v387
    %v444 = vpack.c.b16 %v390, %v389
    %v445 = vpack.c.b16 %v392, %v391
    %v446 = vpack.c.b16 %v394, %v393
    %v447 = vpack.c.b16 %v396, %v395
    %v448 = vpack.c.b16 %v398, %v397
    %v449 = vpack.c.b16 %v400, %v399
    %vm499 = vcmask 130048
    %v501 = vsel %vm499, %v102, 0
    %503 = vmatpush.bf16.msra.mxu0 %v408
    %504 = vmatpush.bf16.msra.mxu0 %v407
    %505 = vmatpush.bf16.msra.mxu0 %v406
    %506 = vmatpush.bf16.msra.mxu0 %v405
    %507 = vmatpush.bf16.msra.mxu0 %v404
    %508 = vmatpush.bf16.msra.mxu0 %v403
    %509 = vmatpush.bf16.msra.mxu0 %v402
    %510 = vmatpush.bf16.msra.mxu0 %v401
    %511 = vmatmul.bf16.gmra.mxu0 %v96
    %v512 = vpop.f32.mrf.mxu0
    %v513 = vadd.f32 %v203, %v512
    %v514 = vpop.f32.mrf.mxu0
    %515 = vdwg.mxu0
    %516 = vmatpush.bf16.msra.mxu0 %v416
    %517 = vmatpush.bf16.msra.mxu0 %v415
    %518 = vmatpush.bf16.msra.mxu0 %v414
    %519 = vmatpush.bf16.msra.mxu0 %v413
    %520 = vmatpush.bf16.msra.mxu0 %v412
    %521 = vmatpush.bf16.msra.mxu0 %v411
    %522 = vmatpush.bf16.msra.mxu0 %v410
    %523 = vmatpush.bf16.msra.mxu0 %v409
    %524 = vmatmul.bf16.gmra.mxu0 %v97
    %v525 = vpop.f32.mrf.mxu0
    %v526 = vadd.f32 %v513, %v525
    %v527 = vpop.f32.mrf.mxu0
    %528 = vdwg.mxu0
    %529 = vmatpush.bf16.msra.mxu0 %v424
    %530 = vmatpush.bf16.msra.mxu0 %v423
    %531 = vmatpush.bf16.msra.mxu0 %v422
    %532 = vmatpush.bf16.msra.mxu0 %v421
    %533 = vmatpush.bf16.msra.mxu0 %v420
    %534 = vmatpush.bf16.msra.mxu0 %v419
    %535 = vmatpush.bf16.msra.mxu0 %v418
    %536 = vmatpush.bf16.msra.mxu0 %v417
    %537 = vmatmul.bf16.gmra.mxu0 %v98
    %v538 = vpop.f32.mrf.mxu0
    %v539 = vadd.f32 %v526, %v538
    %v540 = vpop.f32.mrf.mxu0
    %541 = vdwg.mxu0
    %542 = vmatpush.bf16.msra.mxu0 %v432
    %543 = vmatpush.bf16.msra.mxu0 %v431
    %544 = vmatpush.bf16.msra.mxu0 %v430
    %545 = vmatpush.bf16.msra.mxu0 %v429
    %546 = vmatpush.bf16.msra.mxu0 %v428
    %547 = vmatpush.bf16.msra.mxu0 %v427
    %548 = vmatpush.bf16.msra.mxu0 %v426
    %549 = vmatpush.bf16.msra.mxu0 %v425
    %550 = vmatmul.bf16.gmra.mxu0 %v99
    %v551 = vpop.f32.mrf.mxu0
    %v552 = vadd.f32 %v539, %v551
    %v553 = vpop.f32.mrf.mxu0
    %554 = vdwg.mxu0
    %555 = vmatpush.bf16.msra.mxu0 %v440
    %556 = vmatpush.bf16.msra.mxu0 %v439
    %557 = vmatpush.bf16.msra.mxu0 %v438
    %558 = vmatpush.bf16.msra.mxu0 %v437
    %559 = vmatpush.bf16.msra.mxu0 %v436
    %560 = vmatpush.bf16.msra.mxu0 %v435
    %561 = vmatpush.bf16.msra.mxu0 %v434
    %562 = vmatpush.bf16.msra.mxu0 %v433
    %563 = vmatmul.bf16.gmra.mxu0 %v100
    %v564 = vpop.f32.mrf.mxu0
    %v565 = vadd.f32 %v552, %v564
    %v566 = vpop.f32.mrf.mxu0
    %567 = vdwg.mxu0
    %568 = vmatpush.bf16.msra.mxu0 %v448
    %569 = vmatpush.bf16.msra.mxu0 %v447
    %570 = vmatpush.bf16.msra.mxu0 %v446
    %571 = vmatpush.bf16.msra.mxu0 %v445
    %572 = vmatpush.bf16.msra.mxu0 %v444
    %573 = vmatpush.bf16.msra.mxu0 %v443
    %574 = vmatpush.bf16.msra.mxu0 %v442
    %575 = vmatpush.bf16.msra.mxu0 %v441
    %576 = vmatmul.bf16.gmra.mxu0 %v101
    %v577 = vpop.f32.mrf.mxu0
    %v578 = vadd.f32 %v565, %v577
    %v579 = vpop.f32.mrf.mxu0
    %580 = vdwg.mxu0
    %581 = vmatpush.bf16.msra.mxu0 0
    %582 = vmatpush.bf16.msra.mxu0 0
    %583 = vmatpush.bf16.msra.mxu0 0
    %584 = vmatpush.bf16.msra.mxu0 0
    %585 = vmatpush.bf16.msra.mxu0 0
    %586 = vmatpush.bf16.msra.mxu0 0
    %587 = vmatpush.bf16.msra.mxu0 0
    %588 = vmatpush.bf16.msra.mxu0 %v449
    %589 = vmatmul.bf16.gmra.mxu0 %v501
    %v590 = vpop.f32.mrf.mxu0
    %v591 = vadd.f32 %v578, %v590
    %v592 = vpop.f32.mrf.mxu0
    %593 = vdwg.mxu0
    %v594 = vmax.f32 %v591, 0.0
    %v595 = vpack.c.bf16 %v594, %v594
    %v596 = vld [vmem:[#allocation7] sm:$0xf]
    %v597 = vld [vmem:[#allocation7 + $0x4] sm:$0xf]
    %v598 = vld [vmem:[#allocation7 + $0x8] sm:$0xf]
    %v599 = vld [vmem:[#allocation7 + $0xc] sm:$0xf]
    %v600 = vld [vmem:[#allocation7 + $0x10] sm:$0xf]
    %v601 = vld [vmem:[#allocation7 + $0x14] sm:$0xf]
    %v602 = vld [vmem:[#allocation7 + $0x18] sm:$0xf]
    %v603 = vld [vmem:[#allocation7 + $0x1c] sm:$0xf]
    %v604 = vld [vmem:[#allocation7 + $0x20] sm:$0xf]
    %v605 = vld [vmem:[#allocation7 + $0x24] sm:$0xf]
    %v606 = vld [vmem:[#allocation7 + $0x28] sm:$0xf]
    %v607 = vld [vmem:[#allocation7 + $0x2c] sm:$0xf]
    %v608 = vld [vmem:[#allocation7 + $0x30] sm:$0xf]
    %v609 = vld [vmem:[#allocation7 + $0x34] sm:$0xf]
    %v610 = vld [vmem:[#allocation7 + $0x38] sm:$0xf]
    %v611 = vld [vmem:[#allocation7 + $0x3c] sm:$0xf]
    %v612 = vld [vmem:[%s4] sm:$0x1]
    %v614 = vperm.slane %v612, 0
    %v632 = vunpack.c.l.b16 %v596
    %v633 = vunpack.c.l.b16 %v597
    %v634 = vunpack.c.l.b16 %v598
    %v635 = vunpack.c.l.b16 %v599
    %v636 = vunpack.c.l.b16 %v600
    %v637 = vunpack.c.l.b16 %v601
    %v638 = vunpack.c.l.b16 %v602
    %v639 = vunpack.c.l.b16 %v603
    %v640 = vunpack.c.l.b16 %v604
    %v641 = vunpack.c.l.b16 %v605
    %v642 = vunpack.c.l.b16 %v606
    %v643 = vunpack.c.l.b16 %v607
    %v644 = vunpack.c.l.b16 %v608
    %v645 = vunpack.c.l.b16 %v609
    %v646 = vunpack.c.l.b16 %v610
    %v647 = vunpack.c.l.b16 %v611
    %v648 = vpack.c.b16 %v633, %v632
    %v649 = vpack.c.b16 %v635, %v634
    %v650 = vpack.c.b16 %v637, %v636
    %v651 = vpack.c.b16 %v639, %v638
    %v652 = vpack.c.b16 %v641, %v640
    %v653 = vpack.c.b16 %v643, %v642
    %v654 = vpack.c.b16 %v645, %v644
    %v655 = vpack.c.b16 %v647, %v646
    %664 = vmatpush.bf16.msra.mxu0 %v655
    %665 = vmatpush.bf16.msra.mxu0 %v654
    %666 = vmatpush.bf16.msra.mxu0 %v653
    %667 = vmatpush.bf16.msra.mxu0 %v652
    %668 = vmatpush.bf16.msra.mxu0 %v651
    %669 = vmatpush.bf16.msra.mxu0 %v650
    %670 = vmatpush.bf16.msra.mxu0 %v649
    %671 = vmatpush.bf16.msra.mxu0 %v648
    %672 = vmatmul.bf16.gmra.mxu0 %v595
    %v673 = vpop.f32.mrf.mxu0
    %v674 = vadd.f32 %v614, %v673
    %v675 = vpop.f32.mrf.mxu0
    %676 = vdwg.mxu0
    %v677 = vmax.f32 %v674, 0.0
    %v678 = vpack.c.bf16 %v677, %v677
    %v679 = vld [vmem:[#allocation8] sm:$0xf]
    %v680 = vld [vmem:[#allocation8 + $0x4] sm:$0xf]
    %v681 = vld [vmem:[#allocation8 + $0x8] sm:$0xf]
    %v682 = vld [vmem:[#allocation8 + $0xc] sm:$0xf]
    %v683 = vld [vmem:[#allocation8 + $0x10] sm:$0xf]
    %v684 = vld [vmem:[#allocation8 + $0x14] sm:$0xf]
    %v685 = vld [vmem:[#allocation8 + $0x18] sm:$0xf]
    %v686 = vld [vmem:[#allocation8 + $0x1c] sm:$0xf]
    %v687 = vld [vmem:[#allocation8 + $0x20] sm:$0xf]
    %v688 = vld [vmem:[#allocation8 + $0x24] sm:$0xf]
    %v689 = vld [vmem:[#allocation8 + $0x28] sm:$0xf]
    %v690 = vld [vmem:[#allocation8 + $0x2c] sm:$0xf]
    %v691 = vld [vmem:[#allocation8 + $0x30] sm:$0xf]
    %v692 = vld [vmem:[#allocation8 + $0x34] sm:$0xf]
    %v693 = vld [vmem:[#allocation8 + $0x38] sm:$0xf]
    %v694 = vld [vmem:[#allocation8 + $0x3c] sm:$0xf]
    %v695 = vld [vmem:[%s6] sm:$0x1]
    %v697 = vperm.slane %v695, 0
    %v715 = vunpack.c.l.b16 %v679
    %v716 = vunpack.c.l.b16 %v680
    %v717 = vunpack.c.l.b16 %v681
    %v718 = vunpack.c.l.b16 %v682
    %v719 = vunpack.c.l.b16 %v683
    %v720 = vunpack.c.l.b16 %v684
    %v721 = vunpack.c.l.b16 %v685
    %v722 = vunpack.c.l.b16 %v686
    %v723 = vunpack.c.l.b16 %v687
    %v724 = vunpack.c.l.b16 %v688
    %v725 = vunpack.c.l.b16 %v689
    %v726 = vunpack.c.l.b16 %v690
    %v727 = vunpack.c.l.b16 %v691
    %v728 = vunpack.c.l.b16 %v692
    %v729 = vunpack.c.l.b16 %v693
    %v730 = vunpack.c.l.b16 %v694
    %v731 = vpack.c.b16 %v716, %v715
    %v732 = vpack.c.b16 %v718, %v717
    %v733 = vpack.c.b16 %v720, %v719
    %v734 = vpack.c.b16 %v722, %v721
    %v735 = vpack.c.b16 %v724, %v723
    %v736 = vpack.c.b16 %v726, %v725
    %v737 = vpack.c.b16 %v728, %v727
    %v738 = vpack.c.b16 %v730, %v729
    %747 = vmatpush.bf16.msra.mxu0 %v738
    %748 = vmatpush.bf16.msra.mxu0 %v737
    %749 = vmatpush.bf16.msra.mxu0 %v736
    %750 = vmatpush.bf16.msra.mxu0 %v735
    %751 = vmatpush.bf16.msra.mxu0 %v734
    %752 = vmatpush.bf16.msra.mxu0 %v733
    %753 = vmatpush.bf16.msra.mxu0 %v732
    %754 = vmatpush.bf16.msra.mxu0 %v731
    %755 = vmatmul.bf16.gmra.mxu0 %v678
    %v756 = vpop.f32.mrf.mxu0
    %v757 = vadd.f32 %v697, %v756
    %v758 = vpop.f32.mrf.mxu0
    %759 = vdwg.mxu0
    %760 = vst [vmem:[#allocation10] sm:$0xff] %v757
    // Predicated region
    $region46: #{tpu_custom_call.1} parent=1 // pred_check
      _
    $region47: #{tpu_custom_call.1} parent=1 // pred_check_branch
      %762 = sbr.rel (0) target = $region49
    $region48: #{tpu_custom_call.1} parent=1 // pred_region
      %764 = vsyncadd [#allocation4], 0
      %s766 = sshll.u32 [#allocation10], 4
      %s767 = int_to_ptr.vmem [resolvable:$true] %s766
      %s768 = sshll.u32 %s7, 4
      %s769 = int_to_ptr.hbm [resolvable:$true] %s768
      %771 = dma.vmem_to_hbm [thread:$0]  %s767, 128, %s769, [#allocation4]
    $region49: #{tpu_custom_call.1} parent=1 // pred_fallthru
      _
    // Predicated region
    $region50: #{tpu_custom_call.1} parent=1 // pred_check
      _
    $region51: #{tpu_custom_call.1} parent=1 // pred_check_branch
      %773 = sbr.rel (0) target = $region53
    $region52: #{tpu_custom_call.1} parent=1 // pred_region
      %775 = dma.done [#allocation4], 128
    $region53: #{tpu_custom_call.1} parent=1 // pred_fallthru
      _
    %776 = vsyncpa [#allocation3], 1
    %777 = vsyncpa [#allocation6], 1
    %778 = vsyncpa [#allocation9], 1
    %779 = vsyncpa [#allocation4], 1

</llo_original>
